<compile_context>
chip_gen: v7x
topology: tpu7x:2x2x1
jax: 0.10.0
libtpu: 0.0.40
codegen_flags: <defaults>
</compile_context>

<pallas_src>
import jax
import jax.numpy as jnp
from jax import lax
from jax.experimental import pallas as pl
from jax.experimental.pallas import tpu as pltpu


# ----------------------------------------------------------------------------
# One-time weight packing (hoisted out of the per-call path).
# ----------------------------------------------------------------------------
def pack_lstm_weights(w_ih, w_hh, bias, dtype=None):
    """Pack PyTorch-style LSTMCell weights once.

    w_ih: (L, 4H, D), w_hh: (L, 4H, H), bias: (L, 1, 4H)  [combined b_ih + b_hh],
    all in PyTorch gate order (i, f, g, o).

    Returns:
      w_packed: (L, D+H, 4H)  fused, transposed, gate columns reordered to (i, f, o, g)
      b_packed: (L, 1, 4H)    same gate column order
    """
    L, G4, D = w_ih.shape
    H = G4 // 4

    w = jnp.concatenate([w_ih, w_hh], axis=-1)            # (L, 4H, D+H)
    wg = w.reshape(L, 4, H, D + w_hh.shape[-1])
    # PyTorch gate rows (i, f, g, o) -> (i, f, o, g)
    w = jnp.concatenate([wg[:, 0], wg[:, 1], wg[:, 3], wg[:, 2]], axis=1)  # (L, 4H, D+H)
    w_packed = jnp.transpose(w, (0, 2, 1))                # (L, D+H, 4H), lane-dense RHS

    bg = bias.reshape(L, 4, H)
    b_packed = jnp.concatenate([bg[:, 0], bg[:, 1], bg[:, 3], bg[:, 2]],
                               axis=-1).reshape(L, 1, 4 * H)

    if dtype is not None:
        w_packed = w_packed.astype(dtype)                 # e.g. bf16 MXU inputs
    return w_packed, b_packed


# ----------------------------------------------------------------------------
# Single-step kernel (== StackedLSTMCells.forward)
# ----------------------------------------------------------------------------
def _stacked_lstm_step_kernel(x_ref, w_ref, b_ref, h0_ref, c0_ref, hc_ref):
    # x_ref : (B, D)        w_ref: (L, D+H, 4H)   b_ref: (L, 1, 4H)
    # h0/c0 : (L, B, H)     hc_ref: (B, 2*L*H)  packed [h_0..h_{L-1} | c_0..c_{L-1}]
    L, B, H = h0_ref.shape
    D = x_ref.shape[1]

    w = w_ref[...]                        # all layers' weights resident
    w_x = w[:, :D, :]                     # (L, D, 4H)
    w_h = w[:, D:, :]                     # (L, H, 4H)
    b = b_ref[...].astype(jnp.float32)    # (L, 1, 4H)

    # Recurrent gate contributions (+bias) for ALL layers up front: h0 is an input, so
    # there is no inter-layer dependency. These independent MXU matmuls issue
    # back-to-back and hide under the serial x-part chain below.
    h_gates = [
        jnp.dot(h0_ref[l], w_h[l], preferred_element_type=jnp.float32) + b[l]
        for l in range(L)
    ]

    x_in = x_ref[...]                     # (B, D)
    hs, cs = [], []
    for l in range(L):                    # static, fully unrolled layer loop
        gates = jnp.dot(x_in, w_x[l], preferred_element_type=jnp.float32)
        gates = gates + h_gates[l]        # (B, 4H), gate order (i, f, o, g)

        sig = jax.nn.sigmoid(gates[:, :3 * H])   # one contiguous sigmoid slab
        g_g = jnp.tanh(gates[:, 3 * H:])         # one tanh slab

        c_new = sig[:, H:2 * H] * c0_ref[l] + sig[:, :H] * g_g   # f*c + i*g  (f32)
        h_new = sig[:, 2 * H:3 * H] * jnp.tanh(c_new)            # o*tanh(c)

        hs.append(h_new)
        cs.append(c_new)
        x_in = h_new.astype(x_in.dtype)   # dropout p=0.0 / eval -> identity

    # Single lane-dense store of all layers' h and c.
    hc_ref[...] = jnp.concatenate(hs + cs, axis=-1).astype(hc_ref.dtype)


def stacked_lstm_cells(x, h0, c0, w_packed, b_packed):
    """x: (B, D); h0, c0: (L, B, H); w_packed/b_packed from pack_lstm_weights.

    Returns (new_h, new_c), each (L, B, H).  One gridless pallas_call.
    """
    L, B, H = h0.shape

    hc = pl.pallas_call(
        _stacked_lstm_step_kernel,
        out_shape=jax.ShapeDtypeStruct((B, 2 * L * H), x.dtype),
        in_specs=[pl.BlockSpec(memory_space=pltpu.MemorySpace.VMEM) for _ in range(5)],
        out_specs=pl.BlockSpec(memory_space=pltpu.MemorySpace.VMEM),
    )(x, w_packed, b_packed, h0, c0)

    new_h = jnp.transpose(hc[:, :L * H].reshape(B, L, H), (1, 0, 2))
    new_c = jnp.transpose(hc[:, L * H:].reshape(B, L, H), (1, 0, 2))
    return new_h, new_c


# ----------------------------------------------------------------------------
# Sequence kernel: T timesteps inside ONE kernel (weights resident, states carried).
# Each step has exactly the single-step semantics above, driven by xs[t].
# ----------------------------------------------------------------------------
def _stacked_lstm_seq_kernel(xs_ref, w_ref, b_ref, h0_ref, c0_ref,
                             top_ref, hN_ref, cN_ref):
    # xs_ref : (T, B, D)   top_ref: (T, B, H)  top-layer h at every timestep
    # hN/cN  : (L, B, H)   final states
    L, B, H = h0_ref.shape
    T = xs_ref.shape[0]
    D = xs_ref.shape[2]

    w = w_ref[...]                        # loaded once, loop-invariant
    w_x = w[:, :D, :]
    w_h = w[:, D:, :]
    b = b_ref[...].astype(jnp.float32)

    def step(t, carry):
        h_all, c_all = carry              # (L, B, H) f32 each (c stays f32 across steps)
        # Independent recurrent matmuls for all layers, off the serial chain.
        h_gates = [
            jnp.dot(h_all[l].astype(w_h.dtype), w_h[l],
                    preferred_element_type=jnp.float32) + b[l]
            for l in range(L)
        ]
        x_in = xs_ref[t]                  # (B, D)
        hs, cs = [], []
        for l in range(L):
            gates = jnp.dot(x_in, w_x[l], preferred_element_type=jnp.float32)
            gates = gates + h_gates[l]
            sig = jax.nn.sigmoid(gates[:, :3 * H])
            g_g = jnp.tanh(gates[:, 3 * H:])
            c_new = sig[:, H:2 * H] * c_all[l] + sig[:, :H] * g_g
            h_new = sig[:, 2 * H:3 * H] * jnp.tanh(c_new)
            hs.append(h_new)
            cs.append(c_new)
            x_in = h_new.astype(x_in.dtype)
        top_ref[t] = hs[-1].astype(top_ref.dtype)
        return jnp.stack(hs, 0), jnp.stack(cs, 0)

    h_fin, c_fin = lax.fori_loop(
        0, T, step,
        (h0_ref[...].astype(jnp.float32), c0_ref[...].astype(jnp.float32)))

    hN_ref[...] = h_fin.astype(hN_ref.dtype)
    cN_ref[...] = c_fin.astype(cN_ref.dtype)


def stacked_lstm_cells_seq(xs, h0, c0, w_packed, b_packed):
    """xs: (T, B, D). Runs T StackedLSTMCells steps inside one kernel.

    Returns (top_h: (T, B, H), new_h: (L, B, H), new_c: (L, B, H)).
    """
    T, B, D = xs.shape
    L, _, H = h0.shape

    top, hN, cN = pl.pallas_call(
        _stacked_lstm_seq_kernel,
        out_shape=(jax.ShapeDtypeStruct((T, B, H), xs.dtype),
                   jax.ShapeDtypeStruct((L, B, H), h0.dtype),
                   jax.ShapeDtypeStruct((L, B, H), c0.dtype)),
        in_specs=[pl.BlockSpec(memory_space=pltpu.MemorySpace.VMEM) for _ in range(5)],
        out_specs=(pl.BlockSpec(memory_space=pltpu.MemorySpace.VMEM),
                   pl.BlockSpec(memory_space=pltpu.MemorySpace.VMEM),
                   pl.BlockSpec(memory_space=pltpu.MemorySpace.VMEM)),
    )(xs, w_packed, b_packed, h0, c0)
    return top, hN, cN


# ----------------------------------------------------------------------------
# Pure-JAX references mirroring PyTorch StackedLSTMCells.forward.
# ----------------------------------------------------------------------------
def _reference_step(x, h0, c0, w_ih, w_hh, bias):
    L, B, H = h0.shape
    inp = x
    hs, cs = [], []
    for l in range(L):
        gates = inp @ w_ih[l].T + h0[l] @ w_hh[l].T + bias[l, 0]
        i_g = jax.nn.sigmoid(gates[:, 0 * H:1 * H])
        f_g = jax.nn.sigmoid(gates[:, 1 * H:2 * H])
        g_g = jnp.tanh(gates[:, 2 * H:3 * H])
        o_g = jax.nn.sigmoid(gates[:, 3 * H:4 * H])
        c_new = f_g * c0[l] + i_g * g_g
        h_new = o_g * jnp.tanh(c_new)
        hs.append(h_new)
        cs.append(c_new)
        inp = h_new  # dropout p=0.0
    return jnp.stack(hs, 0), jnp.stack(cs, 0)


def _reference_seq(xs, h0, c0, w_ih, w_hh, bias):
    h, c = h0, c0
    tops = []
    for t in range(xs.shape[0]):
        h, c = _reference_step(xs[t], h, c, w_ih, w_hh, bias)
        tops.append(h[-1])
    return jnp.stack(tops, 0), h, c


if __name__ == "__main__":
    L, B, H = 3, 8, 32       # num_layers, batch, hidden (= input_size)
    D = H
    T = 8                    # timesteps for the in-kernel-scan variant

    key = jax.random.PRNGKey(0)
    ks = jax.random.split(key, 7)
    bound = 1.0 / (H ** 0.5)   # PyTorch LSTMCell init: U(-1/sqrt(H), 1/sqrt(H))

    x = jax.random.normal(ks[0], (B, D), jnp.float32)
    h0 = jax.random.normal(ks[1], (L, B, H), jnp.float32)
    c0 = jax.random.normal(ks[2], (L, B, H), jnp.float32)
    w_ih = jax.random.uniform(ks[3], (L, 4 * H, D), jnp.float32, -bound, bound)
    w_hh = jax.random.uniform(ks[4], (L, 4 * H, H), jnp.float32, -bound, bound)
    # bias = b_ih + b_hh, kept as a single combined term, shaped (L, 1, 4H)
    bias = jax.random.uniform(ks[5], (L, 1, 4 * H), jnp.float32, -2 * bound, 2 * bound)
    xs = jax.random.normal(ks[6], (T, B, D), jnp.float32)

    # One-time packing (hoisted out of the per-call path).
    w_packed, b_packed = pack_lstm_weights(w_ih, w_hh, bias)

    # --- single step (== module forward) ---
    new_h, new_c = stacked_lstm_cells(x, h0, c0, w_packed, b_packed)
    jax.block_until_ready((new_h, new_c))
    ref_h, ref_c = _reference_step(x, h0, c0, w_ih, w_hh, bias)
    assert new_h.shape == (L, B, H) and new_c.shape == (L, B, H)
    assert jnp.allclose(new_h, ref_h, atol=2e-3, rtol=2e-3)
    assert jnp.allclose(new_c, ref_c, atol=2e-3, rtol=2e-3)

    # --- T steps inside one kernel (weights resident, states carried) ---
    top, hT, cT = stacked_lstm_cells_seq(xs, h0, c0, w_packed, b_packed)
    jax.block_until_ready((top, hT, cT))
    ref_top, ref_hT, ref_cT = _reference_seq(xs, h0, c0, w_ih, w_hh, bias)
    assert jnp.allclose(top, ref_top, atol=2e-3, rtol=2e-3)
    assert jnp.allclose(hT, ref_hT, atol=2e-3, rtol=2e-3)
    assert jnp.allclose(cT, ref_cT, atol=2e-3, rtol=2e-3)

    print("KERNEL_OK")
</pallas_src>

<mosaic_0001>
module attributes {stable_mosaic.version = 11 : i64} {
  func.func @_stacked_lstm_step_kernel(%arg0: memref<8x32xf32, #tpu.memory_space<vmem>>, %arg1: memref<3x64x128xf32, #tpu.memory_space<vmem>>, %arg2: memref<3x1x128xf32, #tpu.memory_space<vmem>>, %arg3: memref<3x8x32xf32, #tpu.memory_space<vmem>>, %arg4: memref<3x8x32xf32, #tpu.memory_space<vmem>>, %arg5: memref<8x192xf32, #tpu.memory_space<vmem>>) attributes {dimension_semantics = [], scalar_prefetch = 0 : i64, scratch_operands = 0 : i64, tpu.core_type = #tpu.core_type<tc>} {
    %c0 = arith.constant 0 : index
    %c0_0 = arith.constant 0 : index
    %c0_1 = arith.constant 0 : index
    %0 = vector.load %arg1[%c0, %c0_0, %c0_1] : memref<3x64x128xf32, #tpu.memory_space<vmem>>, vector<3x64x128xf32>
    %1 = vector.extract_strided_slice %0 {offsets = [0, 0, 0], sizes = [3, 32, 128], strides = [1, 1, 1]} : vector<3x64x128xf32> to vector<3x32x128xf32>
    %2 = vector.extract_strided_slice %0 {offsets = [0, 32, 0], sizes = [3, 32, 128], strides = [1, 1, 1]} : vector<3x64x128xf32> to vector<3x32x128xf32>
    %c0_2 = arith.constant 0 : index
    %c0_3 = arith.constant 0 : index
    %c0_4 = arith.constant 0 : index
    %3 = vector.load %arg2[%c0_2, %c0_3, %c0_4] : memref<3x1x128xf32, #tpu.memory_space<vmem>>, vector<3x1x128xf32>
    %c0_5 = arith.constant 0 : index
    %c0_6 = arith.constant 0 : index
    %c0_7 = arith.constant 0 : index
    %4 = vector.load %arg3[%c0_5, %c0_6, %c0_7] : memref<3x8x32xf32, #tpu.memory_space<vmem>>, vector<1x8x32xf32>
    %5 = vector.shape_cast %4 : vector<1x8x32xf32> to vector<8x32xf32>
    %6 = vector.extract_strided_slice %2 {offsets = [0, 0, 0], sizes = [1, 32, 128], strides = [1, 1, 1]} : vector<3x32x128xf32> to vector<1x32x128xf32>
    %7 = vector.shape_cast %6 : vector<1x32x128xf32> to vector<32x128xf32>
    %cst = arith.constant dense<0.000000e+00> : vector<8x128xf32>
    %8 = tpu.matmul %5, %7, %cst {dimension_numbers = #tpu.dot_dimension_numbers<[1], [0], [0], [1], [0, 0, 1, 1], [], []>} : vector<8x32xf32>, vector<32x128xf32>, vector<8x128xf32> -> vector<8x128xf32>
    %9 = vector.extract_strided_slice %3 {offsets = [0, 0, 0], sizes = [1, 1, 128], strides = [1, 1, 1]} : vector<3x1x128xf32> to vector<1x1x128xf32>
    %10 = vector.shape_cast %9 : vector<1x1x128xf32> to vector<1x128xf32>
    %11 = vector.broadcast %10 : vector<1x128xf32> to vector<8x128xf32>
    %12 = arith.addf %8, %11 : vector<8x128xf32>
    %c1 = arith.constant 1 : index
    %c0_8 = arith.constant 0 : index
    %c0_9 = arith.constant 0 : index
    %13 = vector.load %arg3[%c1, %c0_8, %c0_9] : memref<3x8x32xf32, #tpu.memory_space<vmem>>, vector<1x8x32xf32>
    %14 = vector.shape_cast %13 : vector<1x8x32xf32> to vector<8x32xf32>
    %15 = vector.extract_strided_slice %2 {offsets = [1, 0, 0], sizes = [1, 32, 128], strides = [1, 1, 1]} : vector<3x32x128xf32> to vector<1x32x128xf32>
    %16 = vector.shape_cast %15 : vector<1x32x128xf32> to vector<32x128xf32>
    %cst_10 = arith.constant dense<0.000000e+00> : vector<8x128xf32>
    %17 = tpu.matmul %14, %16, %cst_10 {dimension_numbers = #tpu.dot_dimension_numbers<[1], [0], [0], [1], [0, 0, 1, 1], [], []>} : vector<8x32xf32>, vector<32x128xf32>, vector<8x128xf32> -> vector<8x128xf32>
    %18 = vector.extract_strided_slice %3 {offsets = [1, 0, 0], sizes = [1, 1, 128], strides = [1, 1, 1]} : vector<3x1x128xf32> to vector<1x1x128xf32>
    %19 = vector.shape_cast %18 : vector<1x1x128xf32> to vector<1x128xf32>
    %20 = vector.broadcast %19 : vector<1x128xf32> to vector<8x128xf32>
    %21 = arith.addf %17, %20 : vector<8x128xf32>
    %c2 = arith.constant 2 : index
    %c0_11 = arith.constant 0 : index
    %c0_12 = arith.constant 0 : index
    %22 = vector.load %arg3[%c2, %c0_11, %c0_12] : memref<3x8x32xf32, #tpu.memory_space<vmem>>, vector<1x8x32xf32>
    %23 = vector.shape_cast %22 : vector<1x8x32xf32> to vector<8x32xf32>
    %24 = vector.extract_strided_slice %2 {offsets = [2, 0, 0], sizes = [1, 32, 128], strides = [1, 1, 1]} : vector<3x32x128xf32> to vector<1x32x128xf32>
    %25 = vector.shape_cast %24 : vector<1x32x128xf32> to vector<32x128xf32>
    %cst_13 = arith.constant dense<0.000000e+00> : vector<8x128xf32>
    %26 = tpu.matmul %23, %25, %cst_13 {dimension_numbers = #tpu.dot_dimension_numbers<[1], [0], [0], [1], [0, 0, 1, 1], [], []>} : vector<8x32xf32>, vector<32x128xf32>, vector<8x128xf32> -> vector<8x128xf32>
    %27 = vector.extract_strided_slice %3 {offsets = [2, 0, 0], sizes = [1, 1, 128], strides = [1, 1, 1]} : vector<3x1x128xf32> to vector<1x1x128xf32>
    %28 = vector.shape_cast %27 : vector<1x1x128xf32> to vector<1x128xf32>
    %29 = vector.broadcast %28 : vector<1x128xf32> to vector<8x128xf32>
    %30 = arith.addf %26, %29 : vector<8x128xf32>
    %c0_14 = arith.constant 0 : index
    %c0_15 = arith.constant 0 : index
    %31 = vector.load %arg0[%c0_14, %c0_15] : memref<8x32xf32, #tpu.memory_space<vmem>>, vector<8x32xf32>
    %32 = vector.extract_strided_slice %1 {offsets = [0, 0, 0], sizes = [1, 32, 128], strides = [1, 1, 1]} : vector<3x32x128xf32> to vector<1x32x128xf32>
    %33 = vector.shape_cast %32 : vector<1x32x128xf32> to vector<32x128xf32>
    %cst_16 = arith.constant dense<0.000000e+00> : vector<8x128xf32>
    %34 = tpu.matmul %31, %33, %cst_16 {dimension_numbers = #tpu.dot_dimension_numbers<[1], [0], [0], [1], [0, 0, 1, 1], [], []>} : vector<8x32xf32>, vector<32x128xf32>, vector<8x128xf32> -> vector<8x128xf32>
    %35 = arith.addf %34, %12 : vector<8x128xf32>
    %36 = vector.extract_strided_slice %35 {offsets = [0, 0], sizes = [8, 96], strides = [1, 1]} : vector<8x128xf32> to vector<8x96xf32>
    %37 = arith.negf %36 : vector<8x96xf32>
    %38 = math.exp %37 : vector<8x96xf32>
    %cst_17 = arith.constant 1.000000e+00 : f32
    %39 = vector.broadcast %cst_17 : f32 to vector<8x96xf32>
    %40 = arith.addf %39, %38 : vector<8x96xf32>
    %41 = arith.divf %39, %40 : vector<8x96xf32>
    %42 = vector.extract_strided_slice %35 {offsets = [0, 96], sizes = [8, 32], strides = [1, 1]} : vector<8x128xf32> to vector<8x32xf32>
    %43 = math.tanh %42 : vector<8x32xf32>
    %44 = vector.extract_strided_slice %41 {offsets = [0, 32], sizes = [8, 32], strides = [1, 1]} : vector<8x96xf32> to vector<8x32xf32>
    %c0_18 = arith.constant 0 : index
    %c0_19 = arith.constant 0 : index
    %c0_20 = arith.constant 0 : index
    %45 = vector.load %arg4[%c0_18, %c0_19, %c0_20] : memref<3x8x32xf32, #tpu.memory_space<vmem>>, vector<1x8x32xf32>
    %46 = vector.shape_cast %45 : vector<1x8x32xf32> to vector<8x32xf32>
    %47 = arith.mulf %44, %46 : vector<8x32xf32>
    %48 = vector.extract_strided_slice %41 {offsets = [0, 0], sizes = [8, 32], strides = [1, 1]} : vector<8x96xf32> to vector<8x32xf32>
    %49 = arith.mulf %48, %43 : vector<8x32xf32>
    %50 = arith.addf %47, %49 : vector<8x32xf32>
    %51 = vector.extract_strided_slice %41 {offsets = [0, 64], sizes = [8, 32], strides = [1, 1]} : vector<8x96xf32> to vector<8x32xf32>
    %52 = math.tanh %50 : vector<8x32xf32>
    %53 = arith.mulf %51, %52 : vector<8x32xf32>
    %54 = vector.extract_strided_slice %1 {offsets = [1, 0, 0], sizes = [1, 32, 128], strides = [1, 1, 1]} : vector<3x32x128xf32> to vector<1x32x128xf32>
    %55 = vector.shape_cast %54 : vector<1x32x128xf32> to vector<32x128xf32>
    %cst_21 = arith.constant dense<0.000000e+00> : vector<8x128xf32>
    %56 = tpu.matmul %53, %55, %cst_21 {dimension_numbers = #tpu.dot_dimension_numbers<[1], [0], [0], [1], [0, 0, 1, 1], [], []>} : vector<8x32xf32>, vector<32x128xf32>, vector<8x128xf32> -> vector<8x128xf32>
    %57 = arith.addf %56, %21 : vector<8x128xf32>
    %58 = vector.extract_strided_slice %57 {offsets = [0, 0], sizes = [8, 96], strides = [1, 1]} : vector<8x128xf32> to vector<8x96xf32>
    %59 = arith.negf %58 : vector<8x96xf32>
    %60 = math.exp %59 : vector<8x96xf32>
    %cst_22 = arith.constant 1.000000e+00 : f32
    %61 = vector.broadcast %cst_22 : f32 to vector<8x96xf32>
    %62 = arith.addf %61, %60 : vector<8x96xf32>
    %63 = arith.divf %61, %62 : vector<8x96xf32>
    %64 = vector.extract_strided_slice %57 {offsets = [0, 96], sizes = [8, 32], strides = [1, 1]} : vector<8x128xf32> to vector<8x32xf32>
    %65 = math.tanh %64 : vector<8x32xf32>
    %66 = vector.extract_strided_slice %63 {offsets = [0, 32], sizes = [8, 32], strides = [1, 1]} : vector<8x96xf32> to vector<8x32xf32>
    %c1_23 = arith.constant 1 : index
    %c0_24 = arith.constant 0 : index
    %c0_25 = arith.constant 0 : index
    %67 = vector.load %arg4[%c1_23, %c0_24, %c0_25] : memref<3x8x32xf32, #tpu.memory_space<vmem>>, vector<1x8x32xf32>
    %68 = vector.shape_cast %67 : vector<1x8x32xf32> to vector<8x32xf32>
    %69 = arith.mulf %66, %68 : vector<8x32xf32>
    %70 = vector.extract_strided_slice %63 {offsets = [0, 0], sizes = [8, 32], strides = [1, 1]} : vector<8x96xf32> to vector<8x32xf32>
    %71 = arith.mulf %70, %65 : vector<8x32xf32>
    %72 = arith.addf %69, %71 : vector<8x32xf32>
    %73 = vector.extract_strided_slice %63 {offsets = [0, 64], sizes = [8, 32], strides = [1, 1]} : vector<8x96xf32> to vector<8x32xf32>
    %74 = math.tanh %72 : vector<8x32xf32>
    %75 = arith.mulf %73, %74 : vector<8x32xf32>
    %76 = vector.extract_strided_slice %1 {offsets = [2, 0, 0], sizes = [1, 32, 128], strides = [1, 1, 1]} : vector<3x32x128xf32> to vector<1x32x128xf32>
    %77 = vector.shape_cast %76 : vector<1x32x128xf32> to vector<32x128xf32>
    %cst_26 = arith.constant dense<0.000000e+00> : vector<8x128xf32>
    %78 = tpu.matmul %75, %77, %cst_26 {dimension_numbers = #tpu.dot_dimension_numbers<[1], [0], [0], [1], [0, 0, 1, 1], [], []>} : vector<8x32xf32>, vector<32x128xf32>, vector<8x128xf32> -> vector<8x128xf32>
    %79 = arith.addf %78, %30 : vector<8x128xf32>
    %80 = vector.extract_strided_slice %79 {offsets = [0, 0], sizes = [8, 96], strides = [1, 1]} : vector<8x128xf32> to vector<8x96xf32>
    %81 = arith.negf %80 : vector<8x96xf32>
    %82 = math.exp %81 : vector<8x96xf32>
    %cst_27 = arith.constant 1.000000e+00 : f32
    %83 = vector.broadcast %cst_27 : f32 to vector<8x96xf32>
    %84 = arith.addf %83, %82 : vector<8x96xf32>
    %85 = arith.divf %83, %84 : vector<8x96xf32>
    %86 = vector.extract_strided_slice %79 {offsets = [0, 96], sizes = [8, 32], strides = [1, 1]} : vector<8x128xf32> to vector<8x32xf32>
    %87 = math.tanh %86 : vector<8x32xf32>
    %88 = vector.extract_strided_slice %85 {offsets = [0, 32], sizes = [8, 32], strides = [1, 1]} : vector<8x96xf32> to vector<8x32xf32>
    %c2_28 = arith.constant 2 : index
    %c0_29 = arith.constant 0 : index
    %c0_30 = arith.constant 0 : index
    %89 = vector.load %arg4[%c2_28, %c0_29, %c0_30] : memref<3x8x32xf32, #tpu.memory_space<vmem>>, vector<1x8x32xf32>
    %90 = vector.shape_cast %89 : vector<1x8x32xf32> to vector<8x32xf32>
    %91 = arith.mulf %88, %90 : vector<8x32xf32>
    %92 = vector.extract_strided_slice %85 {offsets = [0, 0], sizes = [8, 32], strides = [1, 1]} : vector<8x96xf32> to vector<8x32xf32>
    %93 = arith.mulf %92, %87 : vector<8x32xf32>
    %94 = arith.addf %91, %93 : vector<8x32xf32>
    %95 = vector.extract_strided_slice %85 {offsets = [0, 64], sizes = [8, 32], strides = [1, 1]} : vector<8x96xf32> to vector<8x32xf32>
    %96 = math.tanh %94 : vector<8x32xf32>
    %97 = arith.mulf %95, %96 : vector<8x32xf32>
    %98 = tpu.concatenate %53, %75, %97, %50, %72, %94 in 1 : vector<8x32xf32>, vector<8x32xf32>, vector<8x32xf32>, vector<8x32xf32>, vector<8x32xf32>, vector<8x32xf32> -> vector<8x192xf32>
    %c0_31 = arith.constant 0 : index
    %c0_32 = arith.constant 0 : index
    %99 = vector.load %arg5[%c0_31, %c0_32] : memref<8x192xf32, #tpu.memory_space<vmem>>, vector<8x192xf32>
    tpu.vector_store %arg5[%c0_31, %c0_32], %98 {strides = array<i32>} : memref<8x192xf32, #tpu.memory_space<vmem>>, vector<8x192xf32>,
    return
  }
}

</mosaic_0001>

<llo_original>
// kernel: tpu_custom_call.1
$region0: #{tpu_custom_call.1}
  #allocation0 [shape = 'u32[]', space=smem, size = 0x4, offset = 0x4, fixed_abs, tag = 'smem constant byte address 0x4 - core index']
  #allocation1 [shape = 'u32[144,128]{1,0:T(1,128)}', space=vmem, size = 0x12000, scoped, tag = 'internal scratch']
  %s0 = inlined_call_operand.hbm [shape: f32[8,32], index: 0, kind: input, shape index: {}]
  %s1 = inlined_call_operand.hbm [shape: f32[3,64,128], index: 1, kind: input, shape index: {}]
  %s2 = inlined_call_operand.vmem [shape: f32[3,1,128], index: 2, kind: input, shape index: {}]
  %s3 = inlined_call_operand.hbm [shape: f32[3,8,32], index: 3, kind: input, shape index: {}]
  %s4 = inlined_call_operand.hbm [shape: f32[3,8,32], index: 4, kind: input, shape index: {}]
  %s5 = inlined_call_operand.hbm [shape: f32[8,192], index: 5, kind: output, shape index: {}]
  %s6 = sld [smem:[#allocation0]]
  $region46: #{tpu_custom_call.1} parent=0
    _
  %s8 = ssub.s32 1, %s6
  %s9 = scalar_select 0, %s8, %s6
  $region1: #{tpu_custom_call.1} parent=0
    #allocation2 [shape = 'u8[4096]{0}', space=vmem, size = 0x1000, scoped, tag = 'input window, operand 0, single buffered']
    #allocation3 [shape = 's32[1]{0}', space=sflag, size = 0x4, scoped, tag = 'scoped memory for tpu_custom_call.1']
    #allocation4 [shape = 's32[1]{0}', space=sflag, size = 0x4, scoped, tag = 'scoped memory for tpu_custom_call.1']
    #allocation5 [shape = 'u8[98304]{0}', space=vmem, size = 0x18000, scoped, tag = 'input window, operand 1, single buffered']
    #allocation6 [shape = 's32[1]{0}', space=sflag, size = 0x4, scoped, tag = 'scoped memory for tpu_custom_call.1']
    #allocation7 [shape = 'u8[12288]{0}', space=vmem, size = 0x3000, scoped, tag = 'input window, operand 3, single buffered']
    #allocation8 [shape = 'u8[12288]{0}', space=vmem, size = 0x3000, scoped, tag = 'input window, operand 4, single buffered']
    #allocation9 [shape = 's32[1]{0}', space=sflag, size = 0x4, scoped, tag = 'scoped memory for tpu_custom_call.1']
    #allocation10 [shape = 'u8[8192]{0}', space=vmem, size = 0x2000, scoped, tag = 'output window, operand 0, single buffered']
    %10 = vsyncpa [#allocation3], 0
    %11 = vsyncpa [#allocation6], 0
    %12 = vsyncpa [#allocation9], 0
    %13 = vsyncpa [#allocation4], 0
    // Predicated region
    $region2: #{tpu_custom_call.1} parent=1 // pred_check
      _
    $region3: #{tpu_custom_call.1} parent=1 // pred_check_branch
      %15 = sbr.rel (0) target = $region5
    $region4: #{tpu_custom_call.1} parent=1 // pred_region
      %s17 = ssub.s32 128, 128
      %18 = vsyncadd [#allocation3], %s17
      %s20 = sshll.u32 [#allocation2], 4
      %s21 = int_to_ptr.vmem [resolvable:$true] %s20
      %23 = dma.hbm_to_vmem [thread:$0]  %s0, 128, %s21, [#allocation3]
    $region5: #{tpu_custom_call.1} parent=1 // pred_fallthru
      _
    // Predicated region
    $region6: #{tpu_custom_call.1} parent=1 // pred_check
      _
    $region7: #{tpu_custom_call.1} parent=1 // pred_check_branch
      %25 = sbr.rel (0) target = $region9
    $region8: #{tpu_custom_call.1} parent=1 // pred_region
      %s27 = ssub.s32 3072, 3072
      %28 = vsyncadd [#allocation6], %s27
      %s29 = sshll.u32 [#allocation5], 4
      %s30 = int_to_ptr.vmem [resolvable:$true] %s29
      %35 = dma.hbm_to_vmem [thread:$0]  %s1, 3072, %s30, [#allocation6], 128, 128, 8
    $region9: #{tpu_custom_call.1} parent=1 // pred_fallthru
      _
    // Predicated region
    $region10: #{tpu_custom_call.1} parent=1 // pred_check
      _
    $region11: #{tpu_custom_call.1} parent=1 // pred_check_branch
      %37 = sbr.rel (0) target = $region13
    $region12: #{tpu_custom_call.1} parent=1 // pred_region
      _
    $region13: #{tpu_custom_call.1} parent=1 // pred_fallthru
      _
    // Predicated region
    $region14: #{tpu_custom_call.1} parent=1 // pred_check
      _
    $region15: #{tpu_custom_call.1} parent=1 // pred_check_branch
      %39 = sbr.rel (0) target = $region17
    $region16: #{tpu_custom_call.1} parent=1 // pred_region
      %s41 = ssub.s32 384, 384
      %42 = vsyncadd [#allocation6], %s41
      %s43 = sshll.u32 [#allocation7], 4
      %s44 = int_to_ptr.vmem [resolvable:$true] %s43
      %49 = dma.hbm_to_vmem [thread:$0]  %s3, 384, %s44, [#allocation6], 128, 128, 8
    $region17: #{tpu_custom_call.1} parent=1 // pred_fallthru
      _
    // Predicated region
    $region18: #{tpu_custom_call.1} parent=1 // pred_check
      _
    $region19: #{tpu_custom_call.1} parent=1 // pred_check_branch
      %51 = sbr.rel (0) target = $region21
    $region20: #{tpu_custom_call.1} parent=1 // pred_region
      %s53 = ssub.s32 384, 384
      %54 = vsyncadd [#allocation9], %s53
      %s55 = sshll.u32 [#allocation8], 4
      %s56 = int_to_ptr.vmem [resolvable:$true] %s55
      %61 = dma.hbm_to_vmem [thread:$0]  %s4, 384, %s56, [#allocation9], 128, 128, 8
    $region21: #{tpu_custom_call.1} parent=1 // pred_fallthru
      _
    // Predicated region
    $region22: #{tpu_custom_call.1} parent=1 // pred_check
      _
    $region23: #{tpu_custom_call.1} parent=1 // pred_check_branch
      %63 = sbr.rel (0) target = $region25
    $region24: #{tpu_custom_call.1} parent=1 // pred_region
      %64 = dma.done [#allocation3], 128
    $region25: #{tpu_custom_call.1} parent=1 // pred_fallthru
      _
    // Predicated region
    $region26: #{tpu_custom_call.1} parent=1 // pred_check
      _
    $region27: #{tpu_custom_call.1} parent=1 // pred_check_branch
      %66 = sbr.rel (0) target = $region29
    $region28: #{tpu_custom_call.1} parent=1 // pred_region
      %67 = dma.done [#allocation6], 3072
    $region29: #{tpu_custom_call.1} parent=1 // pred_fallthru
      _
    // Predicated region
    $region30: #{tpu_custom_call.1} parent=1 // pred_check
      _
    $region31: #{tpu_custom_call.1} parent=1 // pred_check_branch
      %69 = sbr.rel (0) target = $region33
    $region32: #{tpu_custom_call.1} parent=1 // pred_region
      %70 = dma.done [#allocation6], 384
    $region33: #{tpu_custom_call.1} parent=1 // pred_fallthru
      _
    // Predicated region
    $region34: #{tpu_custom_call.1} parent=1 // pred_check
      _
    $region35: #{tpu_custom_call.1} parent=1 // pred_check_branch
      %72 = sbr.rel (0) target = $region37
    $region36: #{tpu_custom_call.1} parent=1 // pred_region
      %73 = dma.done [#allocation9], 384
    $region37: #{tpu_custom_call.1} parent=1 // pred_fallthru
      _
    %v74 = vld [vmem:[#allocation5] sm:$0xff]
    %v75 = vld [vmem:[#allocation5 + $0x8] sm:$0xff]
    %v76 = vld [vmem:[#allocation5 + $0x10] sm:$0xff]
    %v77 = vld [vmem:[#allocation5 + $0x18] sm:$0xff]
    %v78 = vld [vmem:[#allocation5 + $0x20] sm:$0xff]
    %v79 = vld [vmem:[#allocation5 + $0x28] sm:$0xff]
    %v80 = vld [vmem:[#allocation5 + $0x30] sm:$0xff]
    %v81 = vld [vmem:[#allocation5 + $0x38] sm:$0xff]
    %v82 = vld [vmem:[#allocation5 + $0x40] sm:$0xff]
    %v83 = vld [vmem:[#allocation5 + $0x48] sm:$0xff]
    %v84 = vld [vmem:[#allocation5 + $0x50] sm:$0xff]
    %v85 = vld [vmem:[#allocation5 + $0x58] sm:$0xff]
    %v86 = vld [vmem:[#allocation5 + $0x60] sm:$0xff]
    %v87 = vld [vmem:[#allocation5 + $0x68] sm:$0xff]
    %v88 = vld [vmem:[#allocation5 + $0x70] sm:$0xff]
    %v89 = vld [vmem:[#allocation5 + $0x78] sm:$0xff]
    %v90 = vld [vmem:[#allocation5 + $0x80] sm:$0xff]
    %v91 = vld [vmem:[#allocation5 + $0x88] sm:$0xff]
    %v92 = vld [vmem:[#allocation5 + $0x90] sm:$0xff]
    %v93 = vld [vmem:[#allocation5 + $0x98] sm:$0xff]
    %v94 = vld [vmem:[#allocation5 + $0xa0] sm:$0xff]
    %v95 = vld [vmem:[#allocation5 + $0xa8] sm:$0xff]
    %v96 = vld [vmem:[#allocation5 + $0xb0] sm:$0xff]
    %v97 = vld [vmem:[#allocation5 + $0xb8] sm:$0xff]
    %v98 = vld [vmem:[%s2] sm:$0x1]
    %v99 = vld [vmem:[%s2 + $0x1] sm:$0x1]
    %v100 = vld [vmem:[%s2 + $0x2] sm:$0x1]
    %v101 = vld [vmem:[#allocation7] sm:$0xff]
    %v103 = vlaneseq
    %v104 = vshrl.u32 %v103, 7
    %v105 = vsub.s32 0, %v104
    %v106 = vrot.slane %v98, %v105
    %vm108 = vcmask 261120
    %v110 = vsel %vm108, %v101, 0
    %112 = vmatprep.subr.mxu0 0.0
    %113 = vmatpush1.msra.mxu0 %v78
    %114 = vmatprep.subr.mxu0 0.0
    %115 = vmatpush1.msra.mxu0 %v79
    %116 = vmatprep.subr.mxu0 0.0
    %117 = vmatpush1.msra.mxu0 %v80
    %118 = vmatprep.subr.mxu0 0.0
    %119 = vmatpush1.msra.mxu0 %v81
    %120 = vmatprep.subr.mxu0 0.0
    %121 = vmatpush1.msra.mxu0 0.0
    %122 = vmatprep.subr.mxu0 0.0
    %123 = vmatpush1.msra.mxu0 0.0
    %124 = vmatprep.subr.mxu0 0.0
    %125 = vmatpush1.msra.mxu0 0.0
    %126 = vmatprep.subr.mxu0 0.0
    %127 = vmatpush1.msra.mxu0 0.0
    %128 = vmatprep.subr.mxu0 0.0
    %129 = vmatpush1.msra.mxu0 0.0
    %130 = vmatprep.subr.mxu0 0.0
    %131 = vmatpush1.msra.mxu0 0.0
    %132 = vmatprep.subr.mxu0 0.0
    %133 = vmatpush1.msra.mxu0 0.0
    %134 = vmatprep.subr.mxu0 0.0
    %135 = vmatpush1.msra.mxu0 0.0
    %136 = vmatprep.subr.mxu0 0.0
    %137 = vmatpush1.msra.mxu0 0.0
    %138 = vmatprep.subr.mxu0 0.0
    %139 = vmatpush1.msra.mxu0 0.0
    %140 = vmatprep.subr.mxu0 0.0
    %141 = vmatpush1.msra.mxu0 0.0
    %142 = vmatprep.subr.mxu0 0.0
    %143 = vmatpush1.msra.mxu0 0.0
    %144 = vmatprep.subr.mxu0 0.0
    %145 = vmatpush1.msra.mxu0 0.0
    %146 = vmatprep.subr.mxu0 0.0
    %147 = vmatpush1.msra.mxu0 0.0
    %148 = vmatprep.subr.mxu0 0.0
    %149 = vmatpush1.msra.mxu0 0.0
    %150 = vmatprep.subr.mxu0 0.0
    %151 = vmatpush1.msra.mxu0 0.0
    %152 = vmatprep.subr.mxu0 0.0
    %153 = vmatpush1.msra.mxu0 0.0
    %154 = vmatprep.subr.mxu0 0.0
    %155 = vmatpush1.msra.mxu0 0.0
    %156 = vmatprep.subr.mxu0 0.0
    %157 = vmatpush1.msra.mxu0 0.0
    %158 = vmatprep.subr.mxu0 0.0
    %159 = vmatpush1.msra.mxu0 0.0
    %160 = vmatprep.subr.mxu0 0.0
    %161 = vmatpush1.msra.mxu0 0.0
    %162 = vmatprep.subr.mxu0 0.0
    %163 = vmatpush1.msra.mxu0 0.0
    %164 = vmatprep.subr.mxu0 0.0
    %165 = vmatpush1.msra.mxu0 0.0
    %166 = vmatprep.subr.mxu0 0.0
    %167 = vmatpush1.msra.mxu0 0.0
    %168 = vmatprep.subr.mxu0 0.0
    %169 = vmatpush1.msra.mxu0 0.0
    %170 = vmatprep.subr.mxu0 0.0
    %171 = vmatpush1.msra.mxu0 0.0
    %172 = vmatprep.subr.mxu0 0.0
    %173 = vmatpush1.msra.mxu0 0.0
    %174 = vmatprep.subr.mxu0 0.0
    %175 = vmatpush1.msra.mxu0 0.0
    %176 = vmatprep.mubr.f32.mxu0 0.0
    %177 = vmatmul.mubr.f32.gmra.mrb[0].mxu0 %v110
    %v178 = vpop.f32.mrb[0].mxu0
    %v179 = vadd.f32 %v106, %v178
    %v180 = vpop.f32.mrb[0].mxu0
    %181 = vdwg.mxu0
    %s182 = scalar_lea.vmem [#allocation7], 8
    %v183 = vld [vmem:[%s182] sm:$0xff]
    %v185 = vlaneseq
    %v186 = vshrl.u32 %v185, 7
    %v187 = vsub.s32 0, %v186
    %v188 = vrot.slane %v99, %v187
    %v191 = vsel %vm108, %v183, 0
    %193 = vmatprep.subr.mxu0 0.0
    %194 = vmatpush1.msra.mxu0 %v86
    %195 = vmatprep.subr.mxu0 0.0
    %196 = vmatpush1.msra.mxu0 %v87
    %197 = vmatprep.subr.mxu0 0.0
    %198 = vmatpush1.msra.mxu0 %v88
    %199 = vmatprep.subr.mxu0 0.0
    %200 = vmatpush1.msra.mxu0 %v89
    %201 = vmatprep.subr.mxu0 0.0
    %202 = vmatpush1.msra.mxu0 0.0
    %203 = vmatprep.subr.mxu0 0.0
    %204 = vmatpush1.msra.mxu0 0.0
    %205 = vmatprep.subr.mxu0 0.0
    %206 = vmatpush1.msra.mxu0 0.0
    %207 = vmatprep.subr.mxu0 0.0
    %208 = vmatpush1.msra.mxu0 0.0
    %209 = vmatprep.subr.mxu0 0.0
    %210 = vmatpush1.msra.mxu0 0.0
    %211 = vmatprep.subr.mxu0 0.0
    %212 = vmatpush1.msra.mxu0 0.0
    %213 = vmatprep.subr.mxu0 0.0
    %214 = vmatpush1.msra.mxu0 0.0
    %215 = vmatprep.subr.mxu0 0.0
    %216 = vmatpush1.msra.mxu0 0.0
    %217 = vmatprep.subr.mxu0 0.0
    %218 = vmatpush1.msra.mxu0 0.0
    %219 = vmatprep.subr.mxu0 0.0
    %220 = vmatpush1.msra.mxu0 0.0
    %221 = vmatprep.subr.mxu0 0.0
    %222 = vmatpush1.msra.mxu0 0.0
    %223 = vmatprep.subr.mxu0 0.0
    %224 = vmatpush1.msra.mxu0 0.0
    %225 = vmatprep.subr.mxu0 0.0
    %226 = vmatpush1.msra.mxu0 0.0
    %227 = vmatprep.subr.mxu0 0.0
    %228 = vmatpush1.msra.mxu0 0.0
    %229 = vmatprep.subr.mxu0 0.0
    %230 = vmatpush1.msra.mxu0 0.0
    %231 = vmatprep.subr.mxu0 0.0
    %232 = vmatpush1.msra.mxu0 0.0
    %233 = vmatprep.subr.mxu0 0.0
    %234 = vmatpush1.msra.mxu0 0.0
    %235 = vmatprep.subr.mxu0 0.0
    %236 = vmatpush1.msra.mxu0 0.0
    %237 = vmatprep.subr.mxu0 0.0
    %238 = vmatpush1.msra.mxu0 0.0
    %239 = vmatprep.subr.mxu0 0.0
    %240 = vmatpush1.msra.mxu0 0.0
    %241 = vmatprep.subr.mxu0 0.0
    %242 = vmatpush1.msra.mxu0 0.0
    %243 = vmatprep.subr.mxu0 0.0
    %244 = vmatpush1.msra.mxu0 0.0
    %245 = vmatprep.subr.mxu0 0.0
    %246 = vmatpush1.msra.mxu0 0.0
    %247 = vmatprep.subr.mxu0 0.0
    %248 = vmatpush1.msra.mxu0 0.0
    %249 = vmatprep.subr.mxu0 0.0
    %250 = vmatpush1.msra.mxu0 0.0
    %251 = vmatprep.subr.mxu0 0.0
    %252 = vmatpush1.msra.mxu0 0.0
    %253 = vmatprep.subr.mxu0 0.0
    %254 = vmatpush1.msra.mxu0 0.0
    %255 = vmatprep.subr.mxu0 0.0
    %256 = vmatpush1.msra.mxu0 0.0
    %257 = vmatprep.mubr.f32.mxu0 0.0
    %258 = vmatmul.mubr.f32.gmra.mrb[0].mxu0 %v191
    %v259 = vpop.f32.mrb[0].mxu0
    %v260 = vadd.f32 %v188, %v259
    %v261 = vpop.f32.mrb[0].mxu0
    %262 = vdwg.mxu0
    %s263 = scalar_lea.vmem [#allocation7], 16
    %v264 = vld [vmem:[%s263] sm:$0xff]
    %v266 = vlaneseq
    %v267 = vshrl.u32 %v266, 7
    %v268 = vsub.s32 0, %v267
    %v269 = vrot.slane %v100, %v268
    %v272 = vsel %vm108, %v264, 0
    %274 = vmatprep.subr.mxu0 0.0
    %275 = vmatpush1.msra.mxu0 %v94
    %276 = vmatprep.subr.mxu0 0.0
    %277 = vmatpush1.msra.mxu0 %v95
    %278 = vmatprep.subr.mxu0 0.0
    %279 = vmatpush1.msra.mxu0 %v96
    %280 = vmatprep.subr.mxu0 0.0
    %281 = vmatpush1.msra.mxu0 %v97
    %282 = vmatprep.subr.mxu0 0.0
    %283 = vmatpush1.msra.mxu0 0.0
    %284 = vmatprep.subr.mxu0 0.0
    %285 = vmatpush1.msra.mxu0 0.0
    %286 = vmatprep.subr.mxu0 0.0
    %287 = vmatpush1.msra.mxu0 0.0
    %288 = vmatprep.subr.mxu0 0.0
    %289 = vmatpush1.msra.mxu0 0.0
    %290 = vmatprep.subr.mxu0 0.0
    %291 = vmatpush1.msra.mxu0 0.0
    %292 = vmatprep.subr.mxu0 0.0
    %293 = vmatpush1.msra.mxu0 0.0
    %294 = vmatprep.subr.mxu0 0.0
    %295 = vmatpush1.msra.mxu0 0.0
    %296 = vmatprep.subr.mxu0 0.0
    %297 = vmatpush1.msra.mxu0 0.0
    %298 = vmatprep.subr.mxu0 0.0
    %299 = vmatpush1.msra.mxu0 0.0
    %300 = vmatprep.subr.mxu0 0.0
    %301 = vmatpush1.msra.mxu0 0.0
    %302 = vmatprep.subr.mxu0 0.0
    %303 = vmatpush1.msra.mxu0 0.0
    %304 = vmatprep.subr.mxu0 0.0
    %305 = vmatpush1.msra.mxu0 0.0
    %306 = vmatprep.subr.mxu0 0.0
    %307 = vmatpush1.msra.mxu0 0.0
    %308 = vmatprep.subr.mxu0 0.0
    %309 = vmatpush1.msra.mxu0 0.0
    %310 = vmatprep.subr.mxu0 0.0
    %311 = vmatpush1.msra.mxu0 0.0
    %312 = vmatprep.subr.mxu0 0.0
    %313 = vmatpush1.msra.mxu0 0.0
    %314 = vmatprep.subr.mxu0 0.0
    %315 = vmatpush1.msra.mxu0 0.0
    %316 = vmatprep.subr.mxu0 0.0
    %317 = vmatpush1.msra.mxu0 0.0
    %318 = vmatprep.subr.mxu0 0.0
    %319 = vmatpush1.msra.mxu0 0.0
    %320 = vmatprep.subr.mxu0 0.0
    %321 = vmatpush1.msra.mxu0 0.0
    %322 = vmatprep.subr.mxu0 0.0
    %323 = vmatpush1.msra.mxu0 0.0
    %324 = vmatprep.subr.mxu0 0.0
    %325 = vmatpush1.msra.mxu0 0.0
    %326 = vmatprep.subr.mxu0 0.0
    %327 = vmatpush1.msra.mxu0 0.0
    %328 = vmatprep.subr.mxu0 0.0
    %329 = vmatpush1.msra.mxu0 0.0
    %330 = vmatprep.subr.mxu0 0.0
    %331 = vmatpush1.msra.mxu0 0.0
    %332 = vmatprep.subr.mxu0 0.0
    %333 = vmatpush1.msra.mxu0 0.0
    %334 = vmatprep.subr.mxu0 0.0
    %335 = vmatpush1.msra.mxu0 0.0
    %336 = vmatprep.subr.mxu0 0.0
    %337 = vmatpush1.msra.mxu0 0.0
    %338 = vmatprep.mubr.f32.mxu0 0.0
    %339 = vmatmul.mubr.f32.gmra.mrb[0].mxu0 %v272
    %v340 = vpop.f32.mrb[0].mxu0
    %v341 = vadd.f32 %v269, %v340
    %v342 = vpop.f32.mrb[0].mxu0
    %343 = vdwg.mxu0
    %v344 = vld [vmem:[#allocation2] sm:$0xff]
    %v346 = vsel %vm108, %v344, 0
    %348 = vmatprep.subr.mxu0 0.0
    %349 = vmatpush1.msra.mxu0 %v74
    %350 = vmatprep.subr.mxu0 0.0
    %351 = vmatpush1.msra.mxu0 %v75
    %352 = vmatprep.subr.mxu0 0.0
    %353 = vmatpush1.msra.mxu0 %v76
    %354 = vmatprep.subr.mxu0 0.0
    %355 = vmatpush1.msra.mxu0 %v77
    %356 = vmatprep.subr.mxu0 0.0
    %357 = vmatpush1.msra.mxu0 0.0
    %358 = vmatprep.subr.mxu0 0.0
    %359 = vmatpush1.msra.mxu0 0.0
    %360 = vmatprep.subr.mxu0 0.0
    %361 = vmatpush1.msra.mxu0 0.0
    %362 = vmatprep.subr.mxu0 0.0
    %363 = vmatpush1.msra.mxu0 0.0
    %364 = vmatprep.subr.mxu0 0.0
    %365 = vmatpush1.msra.mxu0 0.0
    %366 = vmatprep.subr.mxu0 0.0
    %367 = vmatpush1.msra.mxu0 0.0
    %368 = vmatprep.subr.mxu0 0.0
    %369 = vmatpush1.msra.mxu0 0.0
    %370 = vmatprep.subr.mxu0 0.0
    %371 = vmatpush1.msra.mxu0 0.0
    %372 = vmatprep.subr.mxu0 0.0
    %373 = vmatpush1.msra.mxu0 0.0
    %374 = vmatprep.subr.mxu0 0.0
    %375 = vmatpush1.msra.mxu0 0.0
    %376 = vmatprep.subr.mxu0 0.0
    %377 = vmatpush1.msra.mxu0 0.0
    %378 = vmatprep.subr.mxu0 0.0
    %379 = vmatpush1.msra.mxu0 0.0
    %380 = vmatprep.subr.mxu0 0.0
    %381 = vmatpush1.msra.mxu0 0.0
    %382 = vmatprep.subr.mxu0 0.0
    %383 = vmatpush1.msra.mxu0 0.0
    %384 = vmatprep.subr.mxu0 0.0
    %385 = vmatpush1.msra.mxu0 0.0
    %386 = vmatprep.subr.mxu0 0.0
    %387 = vmatpush1.msra.mxu0 0.0
    %388 = vmatprep.subr.mxu0 0.0
    %389 = vmatpush1.msra.mxu0 0.0
    %390 = vmatprep.subr.mxu0 0.0
    %391 = vmatpush1.msra.mxu0 0.0
    %392 = vmatprep.subr.mxu0 0.0
    %393 = vmatpush1.msra.mxu0 0.0
    %394 = vmatprep.subr.mxu0 0.0
    %395 = vmatpush1.msra.mxu0 0.0
    %396 = vmatprep.subr.mxu0 0.0
    %397 = vmatpush1.msra.mxu0 0.0
    %398 = vmatprep.subr.mxu0 0.0
    %399 = vmatpush1.msra.mxu0 0.0
    %400 = vmatprep.subr.mxu0 0.0
    %401 = vmatpush1.msra.mxu0 0.0
    %402 = vmatprep.subr.mxu0 0.0
    %403 = vmatpush1.msra.mxu0 0.0
    %404 = vmatprep.subr.mxu0 0.0
    %405 = vmatpush1.msra.mxu0 0.0
    %406 = vmatprep.subr.mxu0 0.0
    %407 = vmatpush1.msra.mxu0 0.0
    %408 = vmatprep.subr.mxu0 0.0
    %409 = vmatpush1.msra.mxu0 0.0
    %410 = vmatprep.subr.mxu0 0.0
    %411 = vmatpush1.msra.mxu0 0.0
    %412 = vmatprep.mubr.f32.mxu0 0.0
    %413 = vmatmul.mubr.f32.gmra.mrb[0].mxu0 %v346
    %v414 = vpop.f32.mrb[0].mxu0
    %v415 = vadd.f32 %v179, %v414
    %v416 = vpop.f32.mrb[0].mxu0
    %417 = vdwg.mxu0
    %v418 = vxor.u32 %v415, 2147483648
    %v419 = vmul.f32 %v418, 1.442695
    %v420 = vpow.pop %v419
    %v421 = vadd.f32 %v420, 1.0
    %v422 = vrcp.pop %v421
    %v423 = vmul.f32 1.0, %v422
    %v424 = vtanh.pop %v415
    %v425 = vld [vmem:[#allocation8] sm:$0xff]
    %427 = vrot.lane.b32.xlu0 %v425, 32
    %v428 = vpop.permute.xlu0 %427
    %v430 = vmul.f32 %v423, %v428
    %432 = vrot.lane.b32.xlu0 %v424, 32
    %v433 = vpop.permute.xlu0 %432
    %v435 = vmul.f32 %v423, %v433
    %437 = vrot.lane.b32.xlu0 %v435, 32
    %v438 = vpop.permute.xlu0 %437
    %v440 = vadd.f32 %v430, %v438
    %v441 = vtanh.pop %v440
    %443 = vrot.lane.b32.xlu0 %v441, 32
    %v444 = vpop.permute.xlu0 %443
    %v446 = vmul.f32 %v423, %v444
    %448 = vrot.lane.b32.xlu0 %v446, 64
    %v449 = vpop.permute.xlu0 %448
    %v450 = vsel %vm108, %v449, 0
    %452 = vmatprep.subr.mxu0 0.0
    %453 = vmatpush1.msra.mxu0 %v82
    %454 = vmatprep.subr.mxu0 0.0
    %455 = vmatpush1.msra.mxu0 %v83
    %456 = vmatprep.subr.mxu0 0.0
    %457 = vmatpush1.msra.mxu0 %v84
    %458 = vmatprep.subr.mxu0 0.0
    %459 = vmatpush1.msra.mxu0 %v85
    %460 = vmatprep.subr.mxu0 0.0
    %461 = vmatpush1.msra.mxu0 0.0
    %462 = vmatprep.subr.mxu0 0.0
    %463 = vmatpush1.msra.mxu0 0.0
    %464 = vmatprep.subr.mxu0 0.0
    %465 = vmatpush1.msra.mxu0 0.0
    %466 = vmatprep.subr.mxu0 0.0
    %467 = vmatpush1.msra.mxu0 0.0
    %468 = vmatprep.subr.mxu0 0.0
    %469 = vmatpush1.msra.mxu0 0.0
    %470 = vmatprep.subr.mxu0 0.0
    %471 = vmatpush1.msra.mxu0 0.0
    %472 = vmatprep.subr.mxu0 0.0
    %473 = vmatpush1.msra.mxu0 0.0
    %474 = vmatprep.subr.mxu0 0.0
    %475 = vmatpush1.msra.mxu0 0.0
    %476 = vmatprep.subr.mxu0 0.0
    %477 = vmatpush1.msra.mxu0 0.0
    %478 = vmatprep.subr.mxu0 0.0
    %479 = vmatpush1.msra.mxu0 0.0
    %480 = vmatprep.subr.mxu0 0.0
    %481 = vmatpush1.msra.mxu0 0.0
    %482 = vmatprep.subr.mxu0 0.0
    %483 = vmatpush1.msra.mxu0 0.0
    %484 = vmatprep.subr.mxu0 0.0
    %485 = vmatpush1.msra.mxu0 0.0
    %486 = vmatprep.subr.mxu0 0.0
    %487 = vmatpush1.msra.mxu0 0.0
    %488 = vmatprep.subr.mxu0 0.0
    %489 = vmatpush1.msra.mxu0 0.0
    %490 = vmatprep.subr.mxu0 0.0
    %491 = vmatpush1.msra.mxu0 0.0
    %492 = vmatprep.subr.mxu0 0.0
    %493 = vmatpush1.msra.mxu0 0.0
    %494 = vmatprep.subr.mxu0 0.0
    %495 = vmatpush1.msra.mxu0 0.0
    %496 = vmatprep.subr.mxu0 0.0
    %497 = vmatpush1.msra.mxu0 0.0
    %498 = vmatprep.subr.mxu0 0.0
    %499 = vmatpush1.msra.mxu0 0.0
    %500 = vmatprep.subr.mxu0 0.0
    %501 = vmatpush1.msra.mxu0 0.0
    %502 = vmatprep.subr.mxu0 0.0
    %503 = vmatpush1.msra.mxu0 0.0
    %504 = vmatprep.subr.mxu0 0.0
    %505 = vmatpush1.msra.mxu0 0.0
    %506 = vmatprep.subr.mxu0 0.0
    %507 = vmatpush1.msra.mxu0 0.0
    %508 = vmatprep.subr.mxu0 0.0
    %509 = vmatpush1.msra.mxu0 0.0
    %510 = vmatprep.subr.mxu0 0.0
    %511 = vmatpush1.msra.mxu0 0.0
    %512 = vmatprep.subr.mxu0 0.0
    %513 = vmatpush1.msra.mxu0 0.0
    %514 = vmatprep.subr.mxu0 0.0
    %515 = vmatpush1.msra.mxu0 0.0
    %516 = vmatprep.mubr.f32.mxu0 0.0
    %517 = vmatmul.mubr.f32.gmra.mrb[0].mxu0 %v450
    %v518 = vpop.f32.mrb[0].mxu0
    %v519 = vadd.f32 %v260, %v518
    %v520 = vpop.f32.mrb[0].mxu0
    %521 = vdwg.mxu0
    %v522 = vxor.u32 %v519, 2147483648
    %v523 = vmul.f32 %v522, 1.442695
    %v524 = vpow.pop %v523
    %v525 = vadd.f32 %v524, 1.0
    %v526 = vrcp.pop %v525
    %v527 = vmul.f32 1.0, %v526
    %v528 = vtanh.pop %v519
    %s529 = scalar_lea.vmem [#allocation8], 8
    %v530 = vld [vmem:[%s529] sm:$0xff]
    %532 = vrot.lane.b32.xlu0 %v530, 32
    %v533 = vpop.permute.xlu0 %532
    %v535 = vmul.f32 %v527, %v533
    %537 = vrot.lane.b32.xlu0 %v528, 32
    %v538 = vpop.permute.xlu0 %537
    %v540 = vmul.f32 %v527, %v538
    %542 = vrot.lane.b32.xlu0 %v540, 32
    %v543 = vpop.permute.xlu0 %542
    %v545 = vadd.f32 %v535, %v543
    %v546 = vtanh.pop %v545
    %548 = vrot.lane.b32.xlu0 %v546, 32
    %v549 = vpop.permute.xlu0 %548
    %v551 = vmul.f32 %v527, %v549
    %553 = vrot.lane.b32.xlu0 %v551, 64
    %v554 = vpop.permute.xlu0 %553
    %v555 = vsel %vm108, %v554, 0
    %557 = vmatprep.subr.mxu0 0.0
    %558 = vmatpush1.msra.mxu0 %v90
    %559 = vmatprep.subr.mxu0 0.0
    %560 = vmatpush1.msra.mxu0 %v91
    %561 = vmatprep.subr.mxu0 0.0
    %562 = vmatpush1.msra.mxu0 %v92
    %563 = vmatprep.subr.mxu0 0.0
    %564 = vmatpush1.msra.mxu0 %v93
    %565 = vmatprep.subr.mxu0 0.0
    %566 = vmatpush1.msra.mxu0 0.0
    %567 = vmatprep.subr.mxu0 0.0
    %568 = vmatpush1.msra.mxu0 0.0
    %569 = vmatprep.subr.mxu0 0.0
    %570 = vmatpush1.msra.mxu0 0.0
    %571 = vmatprep.subr.mxu0 0.0
    %572 = vmatpush1.msra.mxu0 0.0
    %573 = vmatprep.subr.mxu0 0.0
    %574 = vmatpush1.msra.mxu0 0.0
    %575 = vmatprep.subr.mxu0 0.0
    %576 = vmatpush1.msra.mxu0 0.0
    %577 = vmatprep.subr.mxu0 0.0
    %578 = vmatpush1.msra.mxu0 0.0
    %579 = vmatprep.subr.mxu0 0.0
    %580 = vmatpush1.msra.mxu0 0.0
    %581 = vmatprep.subr.mxu0 0.0
    %582 = vmatpush1.msra.mxu0 0.0
    %583 = vmatprep.subr.mxu0 0.0
    %584 = vmatpush1.msra.mxu0 0.0
    %585 = vmatprep.subr.mxu0 0.0
    %586 = vmatpush1.msra.mxu0 0.0
    %587 = vmatprep.subr.mxu0 0.0
    %588 = vmatpush1.msra.mxu0 0.0
    %589 = vmatprep.subr.mxu0 0.0
    %590 = vmatpush1.msra.mxu0 0.0
    %591 = vmatprep.subr.mxu0 0.0
    %592 = vmatpush1.msra.mxu0 0.0
    %593 = vmatprep.subr.mxu0 0.0
    %594 = vmatpush1.msra.mxu0 0.0
    %595 = vmatprep.subr.mxu0 0.0
    %596 = vmatpush1.msra.mxu0 0.0
    %597 = vmatprep.subr.mxu0 0.0
    %598 = vmatpush1.msra.mxu0 0.0
    %599 = vmatprep.subr.mxu0 0.0
    %600 = vmatpush1.msra.mxu0 0.0
    %601 = vmatprep.subr.mxu0 0.0
    %602 = vmatpush1.msra.mxu0 0.0
    %603 = vmatprep.subr.mxu0 0.0
    %604 = vmatpush1.msra.mxu0 0.0
    %605 = vmatprep.subr.mxu0 0.0
    %606 = vmatpush1.msra.mxu0 0.0
    %607 = vmatprep.subr.mxu0 0.0
    %608 = vmatpush1.msra.mxu0 0.0
    %609 = vmatprep.subr.mxu0 0.0
    %610 = vmatpush1.msra.mxu0 0.0
    %611 = vmatprep.subr.mxu0 0.0
    %612 = vmatpush1.msra.mxu0 0.0
    %613 = vmatprep.subr.mxu0 0.0
    %614 = vmatpush1.msra.mxu0 0.0
    %615 = vmatprep.subr.mxu0 0.0
    %616 = vmatpush1.msra.mxu0 0.0
    %617 = vmatprep.subr.mxu0 0.0
    %618 = vmatpush1.msra.mxu0 0.0
    %619 = vmatprep.subr.mxu0 0.0
    %620 = vmatpush1.msra.mxu0 0.0
    %621 = vmatprep.mubr.f32.mxu0 0.0
    %622 = vmatmul.mubr.f32.gmra.mrb[0].mxu0 %v555
    %v623 = vpop.f32.mrb[0].mxu0
    %v624 = vadd.f32 %v341, %v623
    %v625 = vpop.f32.mrb[0].mxu0
    %626 = vdwg.mxu0
    %v627 = vxor.u32 %v624, 2147483648
    %v628 = vmul.f32 %v627, 1.442695
    %v629 = vpow.pop %v628
    %v630 = vadd.f32 %v629, 1.0
    %v631 = vrcp.pop %v630
    %v632 = vmul.f32 1.0, %v631
    %v633 = vtanh.pop %v624
    %s634 = scalar_lea.vmem [#allocation8], 16
    %v635 = vld [vmem:[%s634] sm:$0xff]
    %637 = vrot.lane.b32.xlu0 %v635, 32
    %v638 = vpop.permute.xlu0 %637
    %v640 = vmul.f32 %v632, %v638
    %642 = vrot.lane.b32.xlu0 %v633, 32
    %v643 = vpop.permute.xlu0 %642
    %v645 = vmul.f32 %v632, %v643
    %647 = vrot.lane.b32.xlu0 %v645, 32
    %v648 = vpop.permute.xlu0 %647
    %v650 = vadd.f32 %v640, %v648
    %v651 = vtanh.pop %v650
    %653 = vrot.lane.b32.xlu0 %v651, 32
    %v654 = vpop.permute.xlu0 %653
    %v656 = vmul.f32 %v632, %v654
    %658 = vrot.lane.b32.xlu0 %v551, 96
    %v659 = vpop.permute.xlu0 %658
    %662 = vrot.lane.b32.xlu0 %v440, 64
    %v663 = vpop.permute.xlu0 %662
    %666 = vrot.lane.b32.xlu0 %v545, 96
    %v667 = vpop.permute.xlu0 %666
    %v669 = vsel %vm108, %v449, %v659
    %vm670 = vcmask 523264
    %v671 = vsel %vm670, %v669, %v656
    %vm672 = vcmask 785408
    %v673 = vsel %vm672, %v671, %v663
    %v674 = vsel %vm108, %v667, %v650
    %675 = vst [vmem:[#allocation10] sm:$0xff] %v673
    %676 = vst.msk [vmem:[#allocation10 + $0x8] sm:$0xff] %vm670, %v674
    // Predicated region
    $region38: #{tpu_custom_call.1} parent=1 // pred_check
      _
    $region39: #{tpu_custom_call.1} parent=1 // pred_check_branch
      %678 = sbr.rel (0) target = $region41
    $region40: #{tpu_custom_call.1} parent=1 // pred_region
      %s680 = ssub.s32 256, 256
      %681 = vsyncadd [#allocation4], %s680
      %s683 = sshll.u32 [#allocation10], 4
      %s684 = int_to_ptr.vmem [resolvable:$true] %s683
      %686 = dma.vmem_to_hbm [thread:$0]  %s684, 256, %s5, [#allocation4]
    $region41: #{tpu_custom_call.1} parent=1 // pred_fallthru
      _
    // Predicated region
    $region42: #{tpu_custom_call.1} parent=1 // pred_check
      _
    $region43: #{tpu_custom_call.1} parent=1 // pred_check_branch
      %688 = sbr.rel (0) target = $region45
    $region44: #{tpu_custom_call.1} parent=1 // pred_region
      %689 = dma.done [#allocation4], 256
    $region45: #{tpu_custom_call.1} parent=1 // pred_fallthru
      _
    %690 = vsyncpa [#allocation3], 1
    %691 = vsyncpa [#allocation6], 1
    %692 = vsyncpa [#allocation9], 1
    %693 = vsyncpa [#allocation4], 1

</llo_original>
